<compile_context>
chip_gen: v6e
topology: v6e:2x2x1
jax: 0.10.0
libtpu: 0.0.40
codegen_flags: <defaults>
</compile_context>

<pallas_src>
import jax
import jax.numpy as jnp
from jax.experimental import pallas as pl
from jax.experimental.pallas import tpu as pltpu


def _identity_copy_kernel(x_ref, o_ref):
    # Pure full-tile load/store: no in-kernel reshape/transpose, so the DMA
    # engine (not VPU ld/st slots) is the only data mover.
    o_ref[...] = x_ref[...]


# Lane-dense last-dim candidates (all multiples of 128 -> unmasked vst).
_LANE_CHOICES = (2048, 1024, 512, 256, 128)


def _round_up(a: int, b: int) -> int:
    return ((a + b - 1) // b) * b


def _max_block_bytes() -> int:
    """Generation-aware block size (per-buffer, before double-buffering).

    Peak double-buffered footprint ~ 4x this value (in + out, 2 buffers each):
      v7x / v6e: 4 MiB block -> ~16 MiB peak (fits the 32 MiB scoped default)
      v5e:       2 MiB block -> ~8  MiB peak (fits the 16 MiB scoped default)
    """
    try:
        kind = jax.devices()[0].device_kind.lower()
    except Exception:  # pragma: no cover - defensive; assume smallest budget
        return 2 << 20
    if "v7" in kind or "v6" in kind:
        return 4 << 20
    return 2 << 20  # v5e and anything unrecognized


def _identity_copy_pallas(x: jax.Array) -> jax.Array:
    """Tiled, pipelined HBM->VMEM->HBM identity copy (debug path)."""
    n = x.size
    itemsize = jnp.dtype(x.dtype).itemsize
    # Packed sublane tile height: 8 rows for 32-bit, 16 for 16-bit, 32 for 8-bit.
    sub = 8 * max(1, 4 // itemsize)
    max_bytes = _max_block_bytes()

    # Pick a lane width (multiple of 128 dividing n), preferring one that also
    # leaves the row count sublane-dense.
    lanes = None
    for cand in _LANE_CHOICES:
        if n % cand == 0 and (n // cand) % sub == 0 and n // cand >= sub:
            lanes = cand
            break
    if lanes is None:
        for cand in _LANE_CHOICES:
            if n % cand == 0:
                lanes = cand
                break

    flat = x.reshape(-1)
    pad = 0
    if lanes is None:
        # Element count not a multiple of 128: pad to a 128-lane slab and run
        # the same bounded tiled path (no whole-array VMEM block).
        lanes = 128
        pad = _round_up(n, lanes) - n
        flat = jnp.pad(flat, (0, pad))
    rows = flat.size // lanes
    x2d = flat.reshape(rows, lanes)

    if rows <= sub:
        # Tiny array: single full-extent block (full dims satisfy the (8,128) rule).
        row_tile = rows
    else:
        # Fixed sublane-aligned tile, capped by the per-generation block budget,
        # and split so the grid has >=2 steps (lets v7x's 2 TCs share the work).
        max_rows = max(sub, ((max_bytes // (lanes * itemsize)) // sub) * sub)
        row_tile = min(max_rows, max(sub, _round_up(pl.cdiv(rows, 2), sub)))
    grid = (pl.cdiv(rows, row_tile),)

    y2d = pl.pallas_call(
        _identity_copy_kernel,
        out_shape=jax.ShapeDtypeStruct((rows, lanes), x.dtype),
        grid=grid,
        in_specs=[pl.BlockSpec((row_tile, lanes), lambda i: (i, 0))],
        out_specs=pl.BlockSpec((row_tile, lanes), lambda i: (i, 0)),
        # Re-use the input buffer for the output.  NOTE: only avoids a fresh
        # HBM allocation if the caller donates x at the jit boundary
        # (jax.jit(..., donate_argnums=0)); otherwise XLA copies defensively.
        input_output_aliases={0: 0},
        compiler_params=pltpu.CompilerParams(
            # Row tiles are independent -> v7x's 2 TensorCores can split them;
            # harmless on single-TC v5e/v6e.
            dimension_semantics=("parallel",)),
    )(x2d)

    y = y2d.reshape(-1)
    if pad:
        y = y[:n]
    return y.reshape(x.shape)


def training_model_forward(x: jax.Array, *, materialize_copy: bool = False) -> jax.Array:
    """Pallas TPU implementation of TrainingModel.forward (identity pass-through).

    By default the kernel is elided entirely (returns x): an identity copy is
    pure redundant HBM traffic with zero useful compute, so the optimal
    forward is a no-op.  Set materialize_copy=True to run the tiled Pallas
    identity-copy kernel (debugging / pipeline verification).
    """
    if not materialize_copy:
        return x
    return _identity_copy_pallas(x)


if __name__ == "__main__":
    key = jax.random.PRNGKey(0)
    # Small NCHW input consistent with the (image-classification oriented)
    # fit() loop: batch=2, channels=4, spatial=16x16.
    x = jax.random.normal(key, (2, 4, 16, 16), dtype=jnp.float32)

    # Default (recommended) path: kernel elided, zero device work.
    y_fast = training_model_forward(x)
    assert y_fast is x or bool(jnp.all(y_fast == x))

    # Debug path: run the Pallas identity-copy kernel once and verify.
    y = training_model_forward(x, materialize_copy=True)
    y = jax.block_until_ready(y)

    assert y.shape == x.shape and y.dtype == x.dtype
    assert bool(jnp.all(y == x))

    print("KERNEL_OK")
</pallas_src>

<mosaic_0001>
module attributes {stable_mosaic.version = 11 : i64} {
  func.func @_identity_copy_kernel(%arg0: i32, %arg1: memref<8x256xf32, #tpu.memory_space<vmem>>, %arg2: memref<8x256xf32, #tpu.memory_space<vmem>>) attributes {dimension_semantics = [#tpu.dimension_semantics<parallel>], iteration_bounds = array<i64: 1>, scalar_prefetch = 0 : i64, scratch_operands = 0 : i64, tpu.core_type = #tpu.core_type<tc>, window_params = [{transform_indices = @transform_0, window_bounds = array<i64: 8, 256>}, {transform_indices = @transform_1, window_bounds = array<i64: 8, 256>}]} {
    %c0 = arith.constant 0 : index
    %c0_0 = arith.constant 0 : index
    %0 = vector.load %arg1[%c0, %c0_0] : memref<8x256xf32, #tpu.memory_space<vmem>>, vector<8x256xf32>
    %c0_1 = arith.constant 0 : index
    %c0_2 = arith.constant 0 : index
    %1 = vector.load %arg2[%c0_1, %c0_2] : memref<8x256xf32, #tpu.memory_space<vmem>>, vector<8x256xf32>
    tpu.vector_store %arg2[%c0_1, %c0_2], %0 {strides = array<i32>} : memref<8x256xf32, #tpu.memory_space<vmem>>, vector<8x256xf32>,
    return
  }
  func.func @transform_0(%arg0: i32) -> (i32, i32) {
    %c0_i32 = arith.constant 0 : i32
    %c0_i32_0 = arith.constant 0 : i32
    return %arg0, %c0_i32 : i32, i32
  }
  func.func @transform_1(%arg0: i32) -> (i32, i32) {
    %c0_i32 = arith.constant 0 : i32
    %c0_i32_0 = arith.constant 0 : i32
    return %arg0, %c0_i32 : i32, i32
  }
}

</mosaic_0001>

<llo_original>
// kernel: tpu_custom_call.1
$region0: #{tpu_custom_call.1}
  #allocation0 [shape = 'u32[]', space=smem, size = 0x4, offset = 0x4, fixed_abs, tag = 'smem constant byte address 0x4 - core index']
  #allocation1 [shape = 'u32[144,128]{1,0:T(1,128)}', space=vmem, size = 0x12000, scoped, tag = 'internal scratch']
  %s0 = inlined_call_operand.hbm [shape: f32[8,256], index: 0, kind: input, shape index: {}, may-alias: {0,1}]
  %s1 = inlined_call_operand.hbm [shape: f32[8,256], index: 1, kind: output, shape index: {}, may-alias: {0,1}]
  %s2 = sld [smem:[#allocation0]]
  $region18: #{tpu_custom_call.1} parent=0
    _
  %s4 = ssub.s32 1, %s2
  %s5 = scalar_select 0, %s4, %s2
  $region1: #{tpu_custom_call.1} parent=0
    #allocation2 [shape = 'u8[8192]{0}', space=vmem, size = 0x2000, scoped, tag = 'input window, operand 0, single buffered']
    #allocation3 [shape = 's32[1]{0}', space=sflag, size = 0x4, scoped, tag = 'scoped memory for tpu_custom_call.1']
    #allocation4 [shape = 's32[1]{0}', space=sflag, size = 0x4, scoped, tag = 'scoped memory for tpu_custom_call.1']
    #allocation5 [shape = 'u8[8192]{0}', space=vmem, size = 0x2000, scoped, tag = 'output window, operand 0, single buffered']
    %6 = vsyncpa [#allocation3], 0
    %7 = vsyncpa [#allocation4], 0
    // Predicated region
    $region2: #{tpu_custom_call.1} parent=1 // pred_check
      _
    $region3: #{tpu_custom_call.1} parent=1 // pred_check_branch
      %9 = sbr.rel (0) target = $region5
    $region4: #{tpu_custom_call.1} parent=1 // pred_region
      %s11 = ssub.s32 256, 256
      %12 = vsyncadd [#allocation3], %s11
      %s14 = sshll.u32 [#allocation2], 4
      %s15 = int_to_ptr.vmem [resolvable:$true] %s14
      %17 = dma.hbm_to_vmem [thread:$0]  %s0, 256, %s15, [#allocation3]
    $region5: #{tpu_custom_call.1} parent=1 // pred_fallthru
      _
    // Predicated region
    $region6: #{tpu_custom_call.1} parent=1 // pred_check
      _
    $region7: #{tpu_custom_call.1} parent=1 // pred_check_branch
      %19 = sbr.rel (0) target = $region9
    $region8: #{tpu_custom_call.1} parent=1 // pred_region
      %20 = dma.done [#allocation3], 256
    $region9: #{tpu_custom_call.1} parent=1 // pred_fallthru
      _
    %v21 = vld [vmem:[#allocation2] sm:$0xff]
    %v22 = vld [vmem:[#allocation2 + $0x8] sm:$0xff]
    %23 = vst [vmem:[#allocation5] sm:$0xff] %v21
    %24 = vst [vmem:[#allocation5 + $0x8] sm:$0xff] %v22
    // Predicated region
    $region10: #{tpu_custom_call.1} parent=1 // pred_check
      _
    $region11: #{tpu_custom_call.1} parent=1 // pred_check_branch
      %26 = sbr.rel (0) target = $region13
    $region12: #{tpu_custom_call.1} parent=1 // pred_region
      %s28 = ssub.s32 256, 256
      %29 = vsyncadd [#allocation4], %s28
      %s31 = sshll.u32 [#allocation5], 4
      %s32 = int_to_ptr.vmem [resolvable:$true] %s31
      %34 = dma.vmem_to_hbm [thread:$0]  %s32, 256, %s1, [#allocation4]
    $region13: #{tpu_custom_call.1} parent=1 // pred_fallthru
      _
    // Predicated region
    $region14: #{tpu_custom_call.1} parent=1 // pred_check
      _
    $region15: #{tpu_custom_call.1} parent=1 // pred_check_branch
      %36 = sbr.rel (0) target = $region17
    $region16: #{tpu_custom_call.1} parent=1 // pred_region
      %37 = dma.done [#allocation4], 256
    $region17: #{tpu_custom_call.1} parent=1 // pred_fallthru
      _
    %38 = vsyncpa [#allocation3], 1
    %39 = vsyncpa [#allocation4], 1

</llo_original>
